<compile_context>
chip_gen: v7x
topology: tpu7x:2x2x1
jax: 0.10.0
libtpu: 0.0.40
codegen_flags: <defaults>
</compile_context>

<pallas_src>
import jax
import jax.numpy as jnp
from jax.experimental import pallas as pl
from jax.experimental.pallas import tpu as pltpu

# Module constant (torch.jit.Final[float] y = 0.0)
Y_CONST = 0.0


def add_scalar_kernel(x_ref, o_ref):
    # Elementwise hot path on the VPU; constant matches the input dtype
    # (no implicit f32 promotion for bf16 / fp8 inputs).
    v = x_ref[...]
    o_ref[...] = v + jnp.asarray(Y_CONST, dtype=v.dtype)


def _sublane_pack(dtype):
    # Sub-32-bit dtypes pack along sublanes: f32 -> 8, bf16 -> 16, int8 -> 32.
    return max(8, 32 // jnp.dtype(dtype).itemsize)


def m_forward(x, *, target_block_bytes=8 << 20, donate=False):
    """Pallas implementation of M.forward(x) = x + 0.0."""
    orig_shape = x.shape
    dtype = x.dtype
    itemsize = jnp.dtype(dtype).itemsize
    n = x.size
    flat = x.reshape(-1)  # free, no data movement

    # --- choose a lane-dense width (multiple of 128) ------------------------
    cols = None
    for c in (2048, 1024, 512, 256, 128):
        if n % c == 0:
            cols = c
            break

    padded_n = n
    if cols is None:
        # Ragged element count: pad up to a multiple of the lane width and
        # slice back afterwards (keeps the streaming path at roofline instead
        # of a single (1, n) block that can OOM VMEM and wastes 7/8 sublanes).
        cols = 2048 if n >= 2048 else 128
        padded_n = pl.cdiv(n, cols) * cols
        flat = jnp.pad(flat, (0, padded_n - n))

    rows = padded_n // cols
    pack = _sublane_pack(dtype)

    # --- byte-based tile sizing ---------------------------------------------
    tile_rows = (target_block_bytes // (cols * itemsize)) // pack * pack
    tile_rows = max(pack, tile_rows)
    if tile_rows >= rows:
        tile_rows = rows  # full-dim block is always legal
    num_blocks = pl.cdiv(rows, tile_rows)

    # Keep the grid multi-step when possible so v7x's two TensorCores can both
    # stream (no-op on v5e/v6e single-TC chips).
    if num_blocks < 2 and rows >= 2 * pack:
        tile_rows = ((rows // 2 + pack - 1) // pack) * pack
        num_blocks = pl.cdiv(rows, tile_rows)

    x2d = flat.reshape(rows, cols)

    extra_kwargs = {}
    if donate:
        # Only alias when the caller guarantees donation of x; otherwise XLA
        # inserts a defensive copy and HBM traffic doubles.
        extra_kwargs["input_output_aliases"] = {0: 0}

    out2d = pl.pallas_call(
        add_scalar_kernel,
        out_shape=jax.ShapeDtypeStruct((rows, cols), dtype),
        grid=(num_blocks,),
        in_specs=[pl.BlockSpec((tile_rows, cols), lambda i: (i, 0))],
        out_specs=pl.BlockSpec((tile_rows, cols), lambda i: (i, 0)),
        compiler_params=pltpu.CompilerParams(
            dimension_semantics=("parallel",),
            # 2x-in + 2x-out 8 MiB buffers (~32 MiB) + scratch; safe on v5e/v6e
            # (128 MiB physical) and under v7x's 64 MiB physical VMEM.
            vmem_limit_bytes=48 << 20,
        ),
        cost_estimate=pl.CostEstimate(
            flops=n, transcendentals=0, bytes_accessed=2 * n * itemsize
        ),
        **extra_kwargs,
    )(x2d)

    out_flat = out2d.reshape(-1)
    if padded_n != n:
        out_flat = out_flat[:n]
    return out_flat.reshape(orig_shape)


if __name__ == "__main__":
    key = jax.random.PRNGKey(0)
    # Small example input consistent with a generic 4D tensor: (2, 4, 16, 16)
    x = jax.random.normal(key, (2, 4, 16, 16), dtype=jnp.float32)

    out = m_forward(x)
    out = jax.block_until_ready(out)

    # Reference check: M.forward(x) == x + 0.0
    ref = x + 0.0
    assert out.shape == ref.shape and out.dtype == ref.dtype
    assert jnp.allclose(out, ref), "mismatch with reference"
    print("KERNEL_OK")
</pallas_src>

<mosaic_0001>
module attributes {stable_mosaic.version = 11 : i64} {
  func.func @add_scalar_kernel(%arg0: i32, %arg1: memref<1x2048xf32, #tpu.memory_space<vmem>>, %arg2: memref<1x2048xf32, #tpu.memory_space<vmem>>) attributes {dimension_semantics = [#tpu.dimension_semantics<parallel>], iteration_bounds = array<i64: 1>, scalar_prefetch = 0 : i64, scratch_operands = 0 : i64, tpu.core_type = #tpu.core_type<tc>, window_params = [{transform_indices = @transform_0, window_bounds = array<i64: 1, 2048>}, {transform_indices = @transform_1, window_bounds = array<i64: 1, 2048>}]} {
    %c0 = arith.constant 0 : index
    %c0_0 = arith.constant 0 : index
    %0 = vector.load %arg1[%c0, %c0_0] : memref<1x2048xf32, #tpu.memory_space<vmem>>, vector<1x2048xf32>
    %cst = arith.constant 0.000000e+00 : f32
    %1 = vector.broadcast %cst : f32 to vector<1x2048xf32>
    %2 = arith.addf %0, %1 : vector<1x2048xf32>
    %c0_1 = arith.constant 0 : index
    %c0_2 = arith.constant 0 : index
    %3 = vector.load %arg2[%c0_1, %c0_2] : memref<1x2048xf32, #tpu.memory_space<vmem>>, vector<1x2048xf32>
    tpu.vector_store %arg2[%c0_1, %c0_2], %2 {strides = array<i32>} : memref<1x2048xf32, #tpu.memory_space<vmem>>, vector<1x2048xf32>,
    return
  }
  func.func @transform_0(%arg0: i32) -> (i32, i32) {
    %c0_i32 = arith.constant 0 : i32
    %c0_i32_0 = arith.constant 0 : i32
    return %arg0, %c0_i32 : i32, i32
  }
  func.func @transform_1(%arg0: i32) -> (i32, i32) {
    %c0_i32 = arith.constant 0 : i32
    %c0_i32_0 = arith.constant 0 : i32
    return %arg0, %c0_i32 : i32, i32
  }
}

</mosaic_0001>

<llo_original>
// kernel: tpu_custom_call.1
$region0: #{tpu_custom_call.1}
  #allocation0 [shape = 'u32[]', space=smem, size = 0x4, offset = 0x4, fixed_abs, tag = 'smem constant byte address 0x4 - core index']
  #allocation1 [shape = 'u32[144,128]{1,0:T(1,128)}', space=vmem, size = 0x12000, scoped, tag = 'internal scratch']
  %s0 = inlined_call_operand.hbm [shape: f32[1,2048], index: 0, kind: input, shape index: {}]
  %s1 = inlined_call_operand.hbm [shape: f32[1,2048], index: 1, kind: output, shape index: {}]
  %s2 = sld [smem:[#allocation0]]
  $region18: #{tpu_custom_call.1} parent=0
    _
  %s4 = ssub.s32 1, %s2
  %s5 = scalar_select 0, %s4, %s2
  $region1: #{tpu_custom_call.1} parent=0
    #allocation2 [shape = 'u8[8192]{0}', space=vmem, size = 0x2000, scoped, tag = 'input window, operand 0, single buffered']
    #allocation3 [shape = 's32[1]{0}', space=sflag, size = 0x4, scoped, tag = 'scoped memory for tpu_custom_call.1']
    #allocation4 [shape = 's32[1]{0}', space=sflag, size = 0x4, scoped, tag = 'scoped memory for tpu_custom_call.1']
    #allocation5 [shape = 'u8[8192]{0}', space=vmem, size = 0x2000, scoped, tag = 'output window, operand 0, single buffered']
    %6 = vsyncpa [#allocation3], 0
    %7 = vsyncpa [#allocation4], 0
    // Predicated region
    $region2: #{tpu_custom_call.1} parent=1 // pred_check
      _
    $region3: #{tpu_custom_call.1} parent=1 // pred_check_branch
      %9 = sbr.rel (0) target = $region5
    $region4: #{tpu_custom_call.1} parent=1 // pred_region
      %s11 = ssub.s32 256, 256
      %12 = vsyncadd [#allocation3], %s11
      %s14 = sshll.u32 [#allocation2], 4
      %s15 = int_to_ptr.vmem [resolvable:$true] %s14
      %17 = dma.hbm_to_vmem [thread:$0]  %s0, 256, %s15, [#allocation3]
    $region5: #{tpu_custom_call.1} parent=1 // pred_fallthru
      _
    // Predicated region
    $region6: #{tpu_custom_call.1} parent=1 // pred_check
      _
    $region7: #{tpu_custom_call.1} parent=1 // pred_check_branch
      %19 = sbr.rel (0) target = $region9
    $region8: #{tpu_custom_call.1} parent=1 // pred_region
      %20 = dma.done [#allocation3], 256
    $region9: #{tpu_custom_call.1} parent=1 // pred_fallthru
      _
    %v21 = vld [vmem:[#allocation2] sm:$0xff]
    %v22 = vld [vmem:[#allocation2 + $0x8] sm:$0xff]
    %v23 = vadd.f32 %v21, 0.0
    %v24 = vadd.f32 %v22, 0.0
    %25 = vst [vmem:[#allocation5] sm:$0xff] %v23
    %26 = vst [vmem:[#allocation5 + $0x8] sm:$0xff] %v24
    // Predicated region
    $region10: #{tpu_custom_call.1} parent=1 // pred_check
      _
    $region11: #{tpu_custom_call.1} parent=1 // pred_check_branch
      %28 = sbr.rel (0) target = $region13
    $region12: #{tpu_custom_call.1} parent=1 // pred_region
      %s30 = ssub.s32 256, 256
      %31 = vsyncadd [#allocation4], %s30
      %s33 = sshll.u32 [#allocation5], 4
      %s34 = int_to_ptr.vmem [resolvable:$true] %s33
      %36 = dma.vmem_to_hbm [thread:$0]  %s34, 256, %s1, [#allocation4]
    $region13: #{tpu_custom_call.1} parent=1 // pred_fallthru
      _
    // Predicated region
    $region14: #{tpu_custom_call.1} parent=1 // pred_check
      _
    $region15: #{tpu_custom_call.1} parent=1 // pred_check_branch
      %38 = sbr.rel (0) target = $region17
    $region16: #{tpu_custom_call.1} parent=1 // pred_region
      %39 = dma.done [#allocation4], 256
    $region17: #{tpu_custom_call.1} parent=1 // pred_fallthru
      _
    %40 = vsyncpa [#allocation3], 1
    %41 = vsyncpa [#allocation4], 1

</llo_original>
